<compile_context>
chip_gen: v7x
topology: tpu7x:2x2x1
jax: 0.10.0
libtpu: 0.0.40
codegen_flags: <defaults>
</compile_context>

<pallas_src>
import functools

import jax
import jax.numpy as jnp
from jax import lax
from jax.experimental import pallas as pl
from jax.experimental.pallas import tpu as pltpu


_VMEM_LIMIT_BYTES = 32 * 1024 * 1024    # scoped-VMEM request (safe on v5e/v6e/v7x)
_BLOCK_BUDGET = 2 * 1024 * 1024         # bytes per x block (~8-10 MiB total pipelined)


def _pick_hw_tile(HW, C, itemsize):
    """Lane-dense spatial tile that keeps one x block within the byte budget."""
    if C * HW * itemsize <= _BLOCK_BUDGET:
        return HW
    cands = [t for t in (2048, 1024, 512, 256, 128)
             if C * t * itemsize <= _BLOCK_BUDGET]
    if not cands:
        cands = [128]
    for t in cands:                      # prefer exact tiling (no masked boundary)
        if HW % t == 0:
            return t
    return cands[0]                      # partial last tile handled by masking


def _pick_batch_tile(B, C, t_hw, itemsize):
    """Group batch elements per grid step when a single image is tiny."""
    bt = 1
    while bt < B and B % (2 * bt) == 0 and 2 * bt * C * t_hw * itemsize <= _BLOCK_BUDGET:
        bt *= 2
    return bt


def _pool_gate_kernel(w_ref, x_ref, gate_ref, acc_ref, *, hw_total, t_hw, need_mask):
    # w_ref   : SMEM (3,)          conv1d taps (k=3, no bias)
    # x_ref   : VMEM (Bt, C, Thw)  input tile
    # gate_ref: VMEM (Bt, C, 1)    sigmoid gate, written on the last HW tile
    # acc_ref : VMEM (Bt, C, 1)    f32 running per-channel sum
    h = pl.program_id(1)

    @pl.when(h == 0)
    def _init():
        acc_ref[...] = jnp.zeros_like(acc_ref)

    x = x_ref[...].astype(jnp.float32)            # accumulate mean in f32
    if need_mask:                                  # mask OOB lanes of a partial tile
        pos = h * t_hw + lax.broadcasted_iota(jnp.int32, x.shape, 2)
        x = jnp.where(pos < hw_total, x, 0.0)
    acc_ref[...] += jnp.sum(x, axis=2, keepdims=True)          # (Bt, C, 1)

    @pl.when(h == pl.num_programs(1) - 1)
    def _finalize():
        pooled = acc_ref[...] * (1.0 / hw_total)                # (Bt, C, 1) mean
        # k=3 conv along channels, zero padding 1, no bias:
        #   y[c] = w0*pooled[c-1] + w1*pooled[c] + w2*pooled[c+1]
        zero = jnp.zeros_like(pooled[:, :1, :])
        prev = jnp.concatenate([zero, pooled[:, :-1, :]], axis=1)
        nxt = jnp.concatenate([pooled[:, 1:, :], zero], axis=1)
        y = w_ref[0] * prev + w_ref[1] * pooled + w_ref[2] * nxt
        gate_ref[...] = jax.nn.sigmoid(y)


def _scale_kernel(x_ref, gate_ref, o_ref):
    # x_ref: (Bt, C, Thw), gate_ref: (Bt, C, 1) f32, o_ref: (Bt, C, Thw)
    x = x_ref[...].astype(jnp.float32)
    o_ref[...] = (x * gate_ref[...]).astype(o_ref.dtype)


def eca_forward(x, conv_weight):
    """x: (B, C, H, W) NCHW; conv_weight: (1, 1, 3) Conv1d weight (no bias)."""
    B, C, H, W = x.shape
    HW = H * W
    itemsize = jnp.dtype(x.dtype).itemsize

    x_flat = x.reshape(B, C, HW)
    w = conv_weight.reshape(3).astype(jnp.float32)

    t_hw = _pick_hw_tile(HW, C, itemsize)
    b_t = _pick_batch_tile(B, C, t_hw, itemsize)
    n_b = B // b_t
    n_hw = pl.cdiv(HW, t_hw)
    need_mask = (HW % t_hw) != 0

    # ---- Pass 1: tiled global-average-pool + k=3 channel conv + sigmoid ----
    gate = pl.pallas_call(
        functools.partial(_pool_gate_kernel,
                          hw_total=HW, t_hw=t_hw, need_mask=need_mask),
        out_shape=jax.ShapeDtypeStruct((B, C, 1), jnp.float32),
        grid=(n_b, n_hw),
        in_specs=[
            pl.BlockSpec(memory_space=pltpu.SMEM),                     # conv taps
            pl.BlockSpec((b_t, C, t_hw), lambda b, h: (b, 0, h)),      # x tile
        ],
        out_specs=pl.BlockSpec((b_t, C, 1), lambda b, h: (b, 0, 0)),   # resident gate
        scratch_shapes=[pltpu.VMEM((b_t, C, 1), jnp.float32)],
        compiler_params=pltpu.CompilerParams(
            dimension_semantics=("parallel", "arbitrary"),
            vmem_limit_bytes=_VMEM_LIMIT_BYTES,
        ),
        cost_estimate=pl.CostEstimate(
            flops=B * C * (HW + 6),
            transcendentals=B * C,
            bytes_accessed=B * C * HW * itemsize + B * C * 4 + 12,
        ),
    )(w, x_flat)

    # ---- Pass 2: lane-dense broadcast-multiply out = x * gate ----
    out_flat = pl.pallas_call(
        _scale_kernel,
        out_shape=jax.ShapeDtypeStruct((B, C, HW), x.dtype),
        grid=(n_b, n_hw),
        in_specs=[
            pl.BlockSpec((b_t, C, t_hw), lambda b, h: (b, 0, h)),
            pl.BlockSpec((b_t, C, 1), lambda b, h: (b, 0, 0)),
        ],
        out_specs=pl.BlockSpec((b_t, C, t_hw), lambda b, h: (b, 0, h)),
        compiler_params=pltpu.CompilerParams(
            dimension_semantics=("parallel", "parallel"),   # shardable on v7x even at B=1
            vmem_limit_bytes=_VMEM_LIMIT_BYTES,
        ),
        cost_estimate=pl.CostEstimate(
            flops=B * C * HW,
            transcendentals=0,
            bytes_accessed=2 * B * C * HW * itemsize + B * C * 4,
        ),
    )(x_flat, gate)

    return out_flat.reshape(B, C, H, W)


def _reference(x, conv_weight):
    # Pure-JAX reference mirroring the PyTorch module.
    pooled = jnp.mean(x, axis=(2, 3))                       # (B, C)
    w = conv_weight.reshape(3)
    padded = jnp.pad(pooled, ((0, 0), (1, 1)))              # zero pad channels
    y = w[0] * padded[:, :-2] + w[1] * padded[:, 1:-1] + w[2] * padded[:, 2:]
    scale = jax.nn.sigmoid(y)[:, :, None, None]             # (B, C, 1, 1)
    return x * scale


if __name__ == "__main__":
    key = jax.random.PRNGKey(0)
    kx, kw = jax.random.split(key)

    B, C, H, W = 2, 4, 16, 16
    x = jax.random.normal(kx, (B, C, H, W), dtype=jnp.float32)
    # Conv1d(1, 1, kernel_size=3, bias=False) weight: shape (1, 1, 3).
    conv_weight = jax.random.normal(kw, (1, 1, 3), dtype=jnp.float32) * 0.5

    out = eca_forward(x, conv_weight)
    jax.block_until_ready(out)

    ref = _reference(x, conv_weight)
    assert jnp.allclose(out, ref, atol=1e-5, rtol=1e-5), "mismatch vs reference"

    print("KERNEL_OK")
</pallas_src>

<mosaic_0001>
module attributes {stable_mosaic.version = 11 : i64} {
  func.func @_pool_gate_kernel(%arg0: i32, %arg1: i32, %arg2: memref<3xf32, #tpu.memory_space<smem>>, %arg3: memref<2x4x256xf32, #tpu.memory_space<vmem>>, %arg4: memref<2x4x1xf32, #tpu.memory_space<vmem>>, %arg5: memref<2x4x1xf32, #tpu.memory_space<vmem>>) attributes {dimension_semantics = [#tpu.dimension_semantics<parallel>, #tpu.dimension_semantics<arbitrary>], iteration_bounds = array<i64: 1, 1>, scalar_prefetch = 0 : i64, scratch_operands = 1 : i64, tpu.core_type = #tpu.core_type<tc>, window_params = [{transform_indices = @transform_0, window_bounds = array<i64: 3>}, {transform_indices = @transform_1, window_bounds = array<i64: 2, 4, 256>}, {transform_indices = @transform_2, window_bounds = array<i64: 2, 4, 1>}]} {
    %c0_i32 = arith.constant 0 : i32
    %0 = arith.cmpi eq, %arg1, %c0_i32 : i32
    %1 = arith.extui %0 : i1 to i32
    %c0_i32_0 = arith.constant 0 : i32
    %2 = arith.cmpi ne, %1, %c0_i32_0 : i32
    scf.if %2 {
      %cst_11 = arith.constant 0.000000e+00 : f32
      %12 = vector.broadcast %cst_11 : f32 to vector<2x4x1xf32>
      %c0_12 = arith.constant 0 : index
      %c0_13 = arith.constant 0 : index
      %c0_14 = arith.constant 0 : index
      %13 = vector.load %arg5[%c0_12, %c0_13, %c0_14] : memref<2x4x1xf32, #tpu.memory_space<vmem>>, vector<2x4x1xf32>
      tpu.vector_store %arg5[%c0_12, %c0_13, %c0_14], %12 {strides = array<i32>} : memref<2x4x1xf32, #tpu.memory_space<vmem>>, vector<2x4x1xf32>,
    } else {
    }
    %c0 = arith.constant 0 : index
    %c0_1 = arith.constant 0 : index
    %c0_2 = arith.constant 0 : index
    %3 = vector.load %arg3[%c0, %c0_1, %c0_2] : memref<2x4x256xf32, #tpu.memory_space<vmem>>, vector<2x4x256xf32>
    %c0_3 = arith.constant 0 : index
    %c0_4 = arith.constant 0 : index
    %c0_5 = arith.constant 0 : index
    %4 = vector.load %arg5[%c0_3, %c0_4, %c0_5] : memref<2x4x1xf32, #tpu.memory_space<vmem>>, vector<2x4x1xf32>
    %cst = arith.constant dense<0.000000e+00> : vector<2x4xf32>
    %5 = vector.multi_reduction <add>, %3, %cst [2] : vector<2x4x256xf32> to vector<2x4xf32>
    %6 = vector.shape_cast %5 : vector<2x4xf32> to vector<2x4x1xf32>
    %7 = arith.addf %4, %6 : vector<2x4x1xf32>
    %c0_6 = arith.constant 0 : index
    %c0_7 = arith.constant 0 : index
    %c0_8 = arith.constant 0 : index
    %8 = vector.load %arg5[%c0_6, %c0_7, %c0_8] : memref<2x4x1xf32, #tpu.memory_space<vmem>>, vector<2x4x1xf32>
    tpu.vector_store %arg5[%c0_6, %c0_7, %c0_8], %7 {strides = array<i32>} : memref<2x4x1xf32, #tpu.memory_space<vmem>>, vector<2x4x1xf32>,
    %c0_i32_9 = arith.constant 0 : i32
    %9 = arith.cmpi eq, %arg1, %c0_i32_9 : i32
    %10 = arith.extui %9 : i1 to i32
    %c0_i32_10 = arith.constant 0 : i32
    %11 = arith.cmpi ne, %10, %c0_i32_10 : i32
    scf.if %11 {
      %c0_11 = arith.constant 0 : index
      %c0_12 = arith.constant 0 : index
      %c0_13 = arith.constant 0 : index
      %12 = vector.load %arg5[%c0_11, %c0_12, %c0_13] : memref<2x4x1xf32, #tpu.memory_space<vmem>>, vector<2x4x1xf32>
      %cst_14 = arith.constant 3.906250e-03 : f32
      %13 = vector.broadcast %cst_14 : f32 to vector<2x4x1xf32>
      %14 = arith.mulf %12, %13 : vector<2x4x1xf32>
      %cst_15 = arith.constant 0.000000e+00 : f32
      %15 = vector.broadcast %cst_15 : f32 to vector<2x1x1xf32>
      %16 = vector.extract_strided_slice %14 {offsets = [0, 0, 0], sizes = [2, 3, 1], strides = [1, 1, 1]} : vector<2x4x1xf32> to vector<2x3x1xf32>
      %17 = tpu.concatenate %15, %16 in 1 : vector<2x1x1xf32>, vector<2x3x1xf32> -> vector<2x4x1xf32>
      %18 = vector.extract_strided_slice %14 {offsets = [0, 1, 0], sizes = [2, 3, 1], strides = [1, 1, 1]} : vector<2x4x1xf32> to vector<2x3x1xf32>
      %19 = tpu.concatenate %18, %15 in 1 : vector<2x3x1xf32>, vector<2x1x1xf32> -> vector<2x4x1xf32>
      %c0_16 = arith.constant 0 : index
      %20 = memref.load %arg2[%c0_16] : memref<3xf32, #tpu.memory_space<smem>>
      %21 = vector.broadcast %20 : f32 to vector<2x4x1xf32>
      %22 = arith.mulf %21, %17 : vector<2x4x1xf32>
      %c1 = arith.constant 1 : index
      %23 = memref.load %arg2[%c1] : memref<3xf32, #tpu.memory_space<smem>>
      %24 = vector.broadcast %23 : f32 to vector<2x4x1xf32>
      %25 = arith.mulf %24, %14 : vector<2x4x1xf32>
      %26 = arith.addf %22, %25 : vector<2x4x1xf32>
      %c2 = arith.constant 2 : index
      %27 = memref.load %arg2[%c2] : memref<3xf32, #tpu.memory_space<smem>>
      %28 = vector.broadcast %27 : f32 to vector<2x4x1xf32>
      %29 = arith.mulf %28, %19 : vector<2x4x1xf32>
      %30 = arith.addf %26, %29 : vector<2x4x1xf32>
      %31 = arith.negf %30 : vector<2x4x1xf32>
      %32 = math.exp %31 : vector<2x4x1xf32>
      %cst_17 = arith.constant 1.000000e+00 : f32
      %33 = vector.broadcast %cst_17 : f32 to vector<2x4x1xf32>
      %34 = arith.addf %33, %32 : vector<2x4x1xf32>
      %35 = arith.divf %33, %34 : vector<2x4x1xf32>
      %c0_18 = arith.constant 0 : index
      %c0_19 = arith.constant 0 : index
      %c0_20 = arith.constant 0 : index
      %36 = vector.load %arg4[%c0_18, %c0_19, %c0_20] : memref<2x4x1xf32, #tpu.memory_space<vmem>>, vector<2x4x1xf32>
      tpu.vector_store %arg4[%c0_18, %c0_19, %c0_20], %35 {strides = array<i32>} : memref<2x4x1xf32, #tpu.memory_space<vmem>>, vector<2x4x1xf32>,
    } else {
    }
    return
  }
  func.func @transform_0(%arg0: i32, %arg1: i32) -> i32 {
    %c0_i32 = arith.constant 0 : i32
    %c0_i32_0 = arith.constant 0 : i32
    return %c0_i32 : i32
  }
  func.func @transform_1(%arg0: i32, %arg1: i32) -> (i32, i32, i32) {
    %c0_i32 = arith.constant 0 : i32
    %c0_i32_0 = arith.constant 0 : i32
    return %arg0, %c0_i32, %arg1 : i32, i32, i32
  }
  func.func @transform_2(%arg0: i32, %arg1: i32) -> (i32, i32, i32) {
    %c0_i32 = arith.constant 0 : i32
    %c0_i32_0 = arith.constant 0 : i32
    %c0_i32_1 = arith.constant 0 : i32
    return %arg0, %c0_i32, %c0_i32_0 : i32, i32, i32
  }
}

</mosaic_0001>

<llo_original>
// kernel: tpu_custom_call.1
$region0: #{tpu_custom_call.1}
  #allocation0 [shape = 'u32[]', space=smem, size = 0x4, offset = 0x4, fixed_abs, tag = 'smem constant byte address 0x4 - core index']
  #allocation1 [shape = 'u32[144,128]{1,0:T(1,128)}', space=vmem, size = 0x12000, scoped, tag = 'internal scratch']
  #allocation2 [shape = 'f32[2,4,1]{2,1,0:T(4,128)}', space=vmem, size = 0x1000, scoped, tag = 'scratch operand']
  %s0 = inlined_call_operand.hbm [shape: f32[3], index: 0, kind: input, shape index: {}]
  %s1 = inlined_call_operand.hbm [shape: f32[2,4,256], index: 1, kind: input, shape index: {}]
  %s2 = inlined_call_operand.vmem [shape: f32[2,4,1], index: 2, kind: output, shape index: {}]
  %s3 = sld [smem:[#allocation0]]
  $region34: #{tpu_custom_call.1} parent=0
    _
  %s5 = ssub.s32 1, %s3
  %s6 = scalar_select 0, %s5, %s3
  $region1: #{tpu_custom_call.1} parent=0
    #allocation3 [shape = 'u8[512]{0}', space=smem, size = 0x200, scoped, tag = 'input window, operand 0, single buffered']
    #allocation4 [shape = 's32[1]{0}', space=sflag, size = 0x4, scoped, tag = 'scoped memory for tpu_custom_call.1']
    #allocation5 [shape = 's32[1]{0}', space=sflag, size = 0x4, scoped, tag = 'scoped memory for tpu_custom_call.1']
    #allocation6 [shape = 'u8[8192]{0}', space=vmem, size = 0x2000, scoped, tag = 'input window, operand 1, single buffered']
    %7 = vsyncpa [#allocation5], 0
    %8 = vsyncpa [#allocation4], 0
    // Predicated region
    $region2: #{tpu_custom_call.1} parent=1 // pred_check
      _
    $region3: #{tpu_custom_call.1} parent=1 // pred_check_branch
      %10 = sbr.rel (0) target = $region5
    $region4: #{tpu_custom_call.1} parent=1 // pred_region
      %s12 = ssub.s32 16, 16
      %13 = vsyncadd [#allocation5], %s12
      %16 = dma.hbm_to_smem %s0, 16, [#allocation3], [#allocation5]
    $region5: #{tpu_custom_call.1} parent=1 // pred_fallthru
      _
    // Predicated region
    $region6: #{tpu_custom_call.1} parent=1 // pred_check
      _
    $region7: #{tpu_custom_call.1} parent=1 // pred_check_branch
      %18 = sbr.rel (0) target = $region9
    $region8: #{tpu_custom_call.1} parent=1 // pred_region
      %s20 = ssub.s32 256, 256
      %21 = vsyncadd [#allocation4], %s20
      %s22 = sshll.u32 [#allocation6], 4
      %s23 = int_to_ptr.vmem [resolvable:$true] %s22
      %28 = dma.hbm_to_vmem [thread:$0]  %s1, 256, %s23, [#allocation4], 128, 128, 8
    $region9: #{tpu_custom_call.1} parent=1 // pred_fallthru
      _
    // Predicated region
    $region10: #{tpu_custom_call.1} parent=1 // pred_check
      _
    $region11: #{tpu_custom_call.1} parent=1 // pred_check_branch
      %30 = sbr.rel (0) target = $region13
    $region12: #{tpu_custom_call.1} parent=1 // pred_region
      %31 = dma.done [#allocation5], 16
    $region13: #{tpu_custom_call.1} parent=1 // pred_fallthru
      _
    // Predicated region
    $region14: #{tpu_custom_call.1} parent=1 // pred_check
      _
    $region15: #{tpu_custom_call.1} parent=1 // pred_check_branch
      %33 = sbr.rel (0) target = $region17
    $region16: #{tpu_custom_call.1} parent=1 // pred_region
      %34 = dma.done [#allocation4], 256
    $region17: #{tpu_custom_call.1} parent=1 // pred_fallthru
      _
    %35 = sfence
    %p36 = scmp.eq.s32.totalorder 0, 0
    // Predicated region
    $region18: #{tpu_custom_call.1} parent=1 // pred_check
      %p37 = pneg %p36
    $region19: #{tpu_custom_call.1} parent=1 // pred_check_branch
      %39 = sbr.rel (%p37) target = $region21
    $region20: #{tpu_custom_call.1} parent=1 // pred_region
      %vm40 = vcmask 3072
      %41 = vst.msk [vmem:[#allocation2] sm:$0xf] %vm40, 0.0
      %42 = vst.msk [vmem:[#allocation2 + $0x4] sm:$0xf] %vm40, 0.0
    $region21: #{tpu_custom_call.1} parent=1 // pred_fallthru
      _
    %v43 = vld [vmem:[#allocation6] sm:$0xff]
    %v44 = vld [vmem:[#allocation6 + $0x8] sm:$0xff]
    %v45 = vld [vmem:[#allocation2] sm:$0xf]
    %v46 = vld [vmem:[#allocation2 + $0x4] sm:$0xf]
    %v49 = vcombine.high %v43, %v43
    %v50 = vcombine.high %v44, %v44
    %vm53 = vcmask 1043456
    %v54 = vsel %vm53, %v43, 0.0
    %v55 = vsel %vm53, %v49, 0.0
    %v56 = vadd.f32 %v54, %v55
    %57 = vadd.xlane.f32.xlu0 %v56
    %v58 = vpop.xlane.xlu0 %57
    %v59 = vsel %vm53, %v44, 0.0
    %v60 = vsel %vm53, %v50, 0.0
    %v61 = vadd.f32 %v59, %v60
    %62 = vadd.xlane.f32.xlu0 %v61
    %v63 = vpop.xlane.xlu0 %62
    %v64 = vadd.f32 %v45, %v58
    %v65 = vadd.f32 %v46, %v63
    %vm66 = vcmask 3072
    %67 = vst.msk [vmem:[#allocation2] sm:$0xf] %vm66, %v64
    %68 = vst.msk [vmem:[#allocation2 + $0x4] sm:$0xf] %vm66, %v65
    // Predicated region
    $region22: #{tpu_custom_call.1} parent=1 // pred_check
      %p69 = pneg %p36
    $region23: #{tpu_custom_call.1} parent=1 // pred_check_branch
      %71 = sbr.rel (%p69) target = $region25
    $region24: #{tpu_custom_call.1} parent=1 // pred_region
      %v72 = vld [vmem:[#allocation2] sm:$0xf]
      %v73 = vld [vmem:[#allocation2 + $0x4] sm:$0xf]
      %v74 = vmul.f32 %v72, 0.00390625
      %v75 = vmul.f32 %v73, 0.00390625
      %v78 = vrot.slane %v74, 7
      %v79 = vrot.slane %v75, 7
      %vm82 = vcmask 1040384
      %v83 = vsel %vm82, 0.0, %v78
      %v84 = vsel %vm82, 0.0, %v79
      %v85 = vrot.slane %v74, 1
      %v86 = vrot.slane %v75, 1
      %vm89 = vcmask 1042432
      %v90 = vsel %vm89, %v85, 0.0
      %v91 = vsel %vm89, %v86, 0.0
      %s92 = sld [smem:[#allocation3]]
      %v93 = vstv %s92
      %v94 = vmul.f32 %v93, %v83
      %v95 = vmul.f32 %v93, %v84
      %s96 = sld [smem:[#allocation3 + $0x1]]
      %v97 = vstv %s96
      %v98 = vmul.f32 %v97, %v74
      %v99 = vmul.f32 %v97, %v75
      %v100 = vadd.f32 %v94, %v98
      %v101 = vadd.f32 %v95, %v99
      %s102 = sld [smem:[#allocation3 + $0x2]]
      %v103 = vstv %s102
      %v104 = vmul.f32 %v103, %v90
      %v105 = vmul.f32 %v103, %v91
      %v106 = vadd.f32 %v100, %v104
      %v107 = vadd.f32 %v101, %v105
      %v108 = vxor.u32 %v106, 2147483648
      %v109 = vxor.u32 %v107, 2147483648
      %v110 = vmul.f32 %v108, 1.442695
      %v111 = vpow.pop %v110
      %v112 = vmul.f32 %v109, 1.442695
      %v113 = vpow.pop %v112
      %v114 = vadd.f32 %v111, 1.0
      %v115 = vadd.f32 %v113, 1.0
      %v116 = vrcp.pop %v114
      %v117 = vmul.f32 1.0, %v116
      %v118 = vrcp.pop %v115
      %v119 = vmul.f32 1.0, %v118
      %120 = vst.msk [vmem:[%s2] sm:$0xf] %vm66, %v117
      %121 = vst.msk [vmem:[%s2 + $0x4] sm:$0xf] %vm66, %v119
    $region25: #{tpu_custom_call.1} parent=1 // pred_fallthru
      _
    // Predicated region
    $region26: #{tpu_custom_call.1} parent=1 // pred_check
      _
    $region27: #{tpu_custom_call.1} parent=1 // pred_check_branch
      %123 = sbr.rel (0) target = $region29
    $region28: #{tpu_custom_call.1} parent=1 // pred_region
      _
    $region29: #{tpu_custom_call.1} parent=1 // pred_fallthru
      _
    // Predicated region
    $region30: #{tpu_custom_call.1} parent=1 // pred_check
      _
    $region31: #{tpu_custom_call.1} parent=1 // pred_check_branch
      %125 = sbr.rel (0) target = $region33
    $region32: #{tpu_custom_call.1} parent=1 // pred_region
      _
    $region33: #{tpu_custom_call.1} parent=1 // pred_fallthru
      _
    %126 = vsyncpa [#allocation4], 1
    %127 = vsyncpa [#allocation5], 1

</llo_original>
